<compile_context>
chip_gen: v6e
topology: v6e:2x2x1
jax: 0.10.0
libtpu: 0.0.40
codegen_flags: <defaults>
</compile_context>

<pallas_src>
import functools

import jax
import jax.numpy as jnp
from jax.experimental import pallas as pl
from jax.experimental.pallas import tpu as pltpu


def _round_up(n, m):
    return ((n + m - 1) // m) * m


# ---------------------------------------------------------------------------
# Parameter packing — run ONCE at parameter-load time, not per step.
# ---------------------------------------------------------------------------
def pack_lstm_params(wx, bx, wh, bh):
    """Fold per-gate weights/biases into lane-dense stacked matrices.

    wx: (4, Din_x, H), bx: (4, 1, H), wh: (4, H, H), bh: (4, 1, H)
    Returns dict with:
      wx : (Din_x, 4*Hpad)  input projection (used in the big pre-GEMM)
      wh : (Hpad,  4*Hpad)  recurrent projection (VMEM-resident in kernel)
      b  : (1,     4*Hpad)  folded bx + bh (added in the pre-GEMM)
    Padded rows/columns are zero, which keeps the padded hidden lanes of the
    recurrent state exactly zero throughout the sequence.
    """
    n_gates, din_x, h = wx.shape
    assert n_gates == 4 and wh.shape == (4, h, h)
    hpad = _round_up(h, 128)

    wx_p = jnp.zeros((din_x, 4 * hpad), jnp.float32)
    wh_p = jnp.zeros((hpad, 4 * hpad), jnp.float32)
    b_p = jnp.zeros((1, 4 * hpad), jnp.float32)
    for g in range(4):
        col = slice(g * hpad, g * hpad + h)
        wx_p = wx_p.at[:, col].set(wx[g].astype(jnp.float32))
        wh_p = wh_p.at[:h, col].set(wh[g].astype(jnp.float32))
        b_p = b_p.at[:, col].set((bx[g] + bh[g]).reshape(1, h).astype(jnp.float32))
    return dict(wx=wx_p, wh=wh_p, b=b_p, h=h, hpad=hpad, din_x=din_x)


# ---------------------------------------------------------------------------
# Sequence-resident kernel: one grid step == one LSTM timestep.
# ---------------------------------------------------------------------------
def _lstm_seq_kernel(xproj_ref, wh_ref, c0_ref, h0_ref,
                     hseq_ref, final_ref, c_sc, h_sc, *, hpad):
    """
    xproj_ref : (1, B, 4*Hpad)  precomputed x_t @ Wx + (bx+bh)   (pipelined)
    wh_ref    : (Hpad, 4*Hpad)  stacked recurrent weights        (resident)
    c0_ref    : (B, Hpad)       initial cell state               (resident)
    h0_ref    : (B, Hpad)       initial hidden state             (resident)
    hseq_ref  : (1, B, Hpad)    per-step hidden output
    final_ref : (B, 3*Hpad)     [o | c | h] at the last step     (resident)
    c_sc,h_sc : (B, Hpad)       carried state in VMEM scratch
    """
    t = pl.program_id(0)

    @pl.when(t == 0)
    def _():
        c_sc[...] = c0_ref[...]
        h_sc[...] = h0_ref[...]

    # One lane-dense MXU call per step for all four gates; f32 accumulation.
    pre = xproj_ref[0] + jnp.dot(h_sc[...], wh_ref[...],
                                 preferred_element_type=jnp.float32)

    f = jax.nn.sigmoid(pre[:, 0 * hpad:1 * hpad])   # forget gate (w1/r1)
    i = jax.nn.sigmoid(pre[:, 1 * hpad:2 * hpad])   # input  gate (w2/r2)
    k = jnp.tanh(pre[:, 2 * hpad:3 * hpad])         # cell   cand (w3/r3)
    o = jax.nn.sigmoid(pre[:, 3 * hpad:4 * hpad])   # output gate (w4/r4)

    c_new = k * i + f * c_sc[...]
    h_new = o * jnp.tanh(c_new)

    c_sc[...] = c_new
    h_sc[...] = h_new
    hseq_ref[0] = h_new                              # lane-aligned full store

    @pl.when(t == pl.num_programs(0) - 1)
    def _():
        final_ref[:, 0 * hpad:1 * hpad] = o
        final_ref[:, 1 * hpad:2 * hpad] = c_new
        final_ref[:, 2 * hpad:3 * hpad] = h_new


def lstm_sequence(xs, c0, h0, params):
    """Run T LSTM steps inside ONE pallas_call.

    xs: (T, B, Din_x), c0/h0: (B, H).
    Returns (o_T, c_T, h_T, h_seq) with h_seq of shape (T, B, H).
    """
    T, B, din_x = xs.shape
    H, hpad = params["h"], params["hpad"]
    assert din_x == params["din_x"]
    Bp = _round_up(B, 8)

    # cuDNN-style split: batch the non-recurrent input projection over T,
    # with biases folded in (one real GEMM with M = T*B instead of T tiny ones).
    xproj = (jnp.einsum("tbi,ij->tbj", xs.astype(jnp.float32), params["wx"],
                        preferred_element_type=jnp.float32)
             + params["b"])
    if Bp != B:
        xproj = jnp.pad(xproj, ((0, 0), (0, Bp - B), (0, 0)))
    c0p = jnp.zeros((Bp, hpad), jnp.float32).at[:B, :H].set(c0)
    h0p = jnp.zeros((Bp, hpad), jnp.float32).at[:B, :H].set(h0)

    kernel = functools.partial(_lstm_seq_kernel, hpad=hpad)

    cost = pl.CostEstimate(
        flops=2 * T * Bp * hpad * 4 * hpad + 10 * T * Bp * hpad,
        transcendentals=5 * T * Bp * hpad,
        bytes_accessed=(T * Bp * 4 * hpad * 4        # xproj
                        + hpad * 4 * hpad * 4        # Wh (once)
                        + 2 * Bp * hpad * 4          # c0, h0
                        + T * Bp * hpad * 4          # h_seq
                        + Bp * 3 * hpad * 4),        # final slab
    )

    h_seq, final = pl.pallas_call(
        kernel,
        out_shape=[
            jax.ShapeDtypeStruct((T, Bp, hpad), jnp.float32),
            jax.ShapeDtypeStruct((Bp, 3 * hpad), jnp.float32),
        ],
        grid_spec=pltpu.PrefetchScalarGridSpec(
            num_scalar_prefetch=0,
            grid=(T,),
            in_specs=[
                pl.BlockSpec((1, Bp, 4 * hpad), lambda t: (t, 0, 0)),  # xproj_t
                pl.BlockSpec((hpad, 4 * hpad), lambda t: (0, 0)),      # Wh
                pl.BlockSpec((Bp, hpad), lambda t: (0, 0)),            # c0
                pl.BlockSpec((Bp, hpad), lambda t: (0, 0)),            # h0
            ],
            out_specs=[
                pl.BlockSpec((1, Bp, hpad), lambda t: (t, 0, 0)),      # h per step
                pl.BlockSpec((Bp, 3 * hpad), lambda t: (0, 0)),        # final [o|c|h]
            ],
            scratch_shapes=[pltpu.VMEM((Bp, hpad), jnp.float32),
                            pltpu.VMEM((Bp, hpad), jnp.float32)],
        ),
        compiler_params=pltpu.CompilerParams(
            dimension_semantics=("arbitrary",)),     # carried recurrence
        cost_estimate=cost,
    )(xproj, params["wh"], c0p, h0p)

    o_T = final[:B, 0 * hpad:0 * hpad + H]
    c_T = final[:B, 1 * hpad:1 * hpad + H]
    h_T = final[:B, 2 * hpad:2 * hpad + H]
    return o_T, c_T, h_T, h_seq[:, :B, :H]


def lstm_cell(x, c, h, wx, bx, wh, bh, params=None):
    """Single LSTM-cell step matching LSTMcell.forward: returns (o, c, h).

    For repeated stepping, pack params once with pack_lstm_params and call
    lstm_sequence so the time loop lives inside one pallas_call.
    """
    if params is None:
        params = pack_lstm_params(wx, bx, wh, bh)
    o, c_new, h_new, _ = lstm_sequence(x[None], c, h, params)
    return o, c_new, h_new


# ---------------------------------------------------------------------------
# Plain-JAX reference (mirrors the PyTorch forward, f32).
# ---------------------------------------------------------------------------
def lstm_cell_ref(x, c, h, wx, bx, wh, bh):
    def gate_pre(g):
        return x @ wx[g] + bx[g] + h @ wh[g] + bh[g]
    f = jax.nn.sigmoid(gate_pre(0))
    i = jax.nn.sigmoid(gate_pre(1))
    k = jnp.tanh(gate_pre(2))
    o = jax.nn.sigmoid(gate_pre(3))
    c_new = k * i + f * c
    h_new = o * jnp.tanh(c_new)
    return o, c_new, h_new


if __name__ == "__main__":
    input_length = 3
    hidden_length = 20
    batch = 8
    seq_len = 16

    key = jax.random.PRNGKey(0)
    keys = jax.random.split(key, 8)

    # Deterministic parameter init (PyTorch nn.Linear-style uniform bounds).
    bound_x = 1.0 / jnp.sqrt(input_length)
    bound_h = 1.0 / jnp.sqrt(hidden_length)
    # gate order: [forget(w1/r1), input(w2/r2), cell(w3/r3), output(w4/r4)]
    wx = jax.random.uniform(keys[0], (4, input_length, hidden_length),
                            jnp.float32, -bound_x, bound_x)
    bx = jax.random.uniform(keys[1], (4, 1, hidden_length),
                            jnp.float32, -bound_x, bound_x)
    wh = jax.random.uniform(keys[2], (4, hidden_length, hidden_length),
                            jnp.float32, -bound_h, bound_h)
    bh = jax.random.uniform(keys[3], (4, 1, hidden_length),
                            jnp.float32, -bound_h, bound_h)

    xs = jax.random.normal(keys[4], (seq_len, batch, input_length), jnp.float32)
    c0 = jax.random.normal(keys[5], (batch, hidden_length), jnp.float32)
    h0 = jax.random.normal(keys[6], (batch, hidden_length), jnp.float32)

    params = pack_lstm_params(wx, bx, wh, bh)   # packed ONCE, reused below

    # ---- Single step (module semantics: forward(x, c, h) -> (o, c, h)) ----
    o_k, c_k, h_k = lstm_cell(xs[0], c0, h0, wx, bx, wh, bh, params=params)
    jax.block_until_ready((o_k, c_k, h_k))
    o_r, c_r, h_r = lstm_cell_ref(xs[0], c0, h0, wx, bx, wh, bh)
    assert jnp.allclose(o_k, o_r, atol=1e-5, rtol=1e-5)
    assert jnp.allclose(c_k, c_r, atol=1e-5, rtol=1e-5)
    assert jnp.allclose(h_k, h_r, atol=1e-5, rtol=1e-5)

    # ---- Sequence-resident kernel: T steps inside one pallas_call ---------
    seq_fn = jax.jit(functools.partial(lstm_sequence, params=params))
    o_T, c_T, h_T, h_seq = seq_fn(xs, c0, h0)
    jax.block_until_ready((o_T, c_T, h_T, h_seq))

    # Reference: python loop of single-step references.
    c_ref, h_ref, o_ref = c0, h0, None
    h_hist = []
    for t in range(seq_len):
        o_ref, c_ref, h_ref = lstm_cell_ref(xs[t], c_ref, h_ref, wx, bx, wh, bh)
        h_hist.append(h_ref)
    h_hist = jnp.stack(h_hist)

    assert jnp.allclose(o_T, o_ref, atol=1e-4, rtol=1e-4)
    assert jnp.allclose(c_T, c_ref, atol=1e-4, rtol=1e-4)
    assert jnp.allclose(h_T, h_ref, atol=1e-4, rtol=1e-4)
    assert jnp.allclose(h_seq, h_hist, atol=1e-4, rtol=1e-4)

    print("KERNEL_OK")
</pallas_src>

<mosaic_0001>
module attributes {stable_mosaic.version = 11 : i64} {
  func.func @_lstm_seq_kernel(%arg0: i32, %arg1: memref<1x8x512xf32, #tpu.memory_space<vmem>>, %arg2: memref<128x512xf32, #tpu.memory_space<vmem>>, %arg3: memref<8x128xf32, #tpu.memory_space<vmem>>, %arg4: memref<8x128xf32, #tpu.memory_space<vmem>>, %arg5: memref<1x8x128xf32, #tpu.memory_space<vmem>>, %arg6: memref<8x384xf32, #tpu.memory_space<vmem>>, %arg7: memref<8x128xf32, #tpu.memory_space<vmem>>, %arg8: memref<8x128xf32, #tpu.memory_space<vmem>>) attributes {dimension_semantics = [#tpu.dimension_semantics<arbitrary>], iteration_bounds = array<i64: 1>, scalar_prefetch = 0 : i64, scratch_operands = 2 : i64, tpu.core_type = #tpu.core_type<tc>, window_params = [{transform_indices = @transform_0, window_bounds = array<i64: 1, 8, 512>}, {pipeline_mode = #tpu.pipeline_mode<synchronous>, transform_indices = @transform_1, window_bounds = array<i64: 128, 512>}, {pipeline_mode = #tpu.pipeline_mode<synchronous>, transform_indices = @transform_2, window_bounds = array<i64: 8, 128>}, {pipeline_mode = #tpu.pipeline_mode<synchronous>, transform_indices = @transform_3, window_bounds = array<i64: 8, 128>}, {transform_indices = @transform_4, window_bounds = array<i64: 1, 8, 128>}, {pipeline_mode = #tpu.pipeline_mode<synchronous>, transform_indices = @transform_5, window_bounds = array<i64: 8, 384>}]} {
    %c0_i32 = arith.constant 0 : i32
    %0 = arith.cmpi eq, %arg0, %c0_i32 : i32
    %1 = arith.extui %0 : i1 to i32
    %c0_i32_0 = arith.constant 0 : i32
    %2 = arith.cmpi ne, %1, %c0_i32_0 : i32
    scf.if %2 {
      %c0_21 = arith.constant 0 : index
      %c0_22 = arith.constant 0 : index
      %43 = vector.load %arg3[%c0_21, %c0_22] : memref<8x128xf32, #tpu.memory_space<vmem>>, vector<8x128xf32>
      %c0_23 = arith.constant 0 : index
      %c0_24 = arith.constant 0 : index
      %44 = vector.load %arg7[%c0_23, %c0_24] : memref<8x128xf32, #tpu.memory_space<vmem>>, vector<8x128xf32>
      tpu.vector_store %arg7[%c0_23, %c0_24], %43 {strides = array<i32>} : memref<8x128xf32, #tpu.memory_space<vmem>>, vector<8x128xf32>,
      %c0_25 = arith.constant 0 : index
      %c0_26 = arith.constant 0 : index
      %45 = vector.load %arg4[%c0_25, %c0_26] : memref<8x128xf32, #tpu.memory_space<vmem>>, vector<8x128xf32>
      %c0_27 = arith.constant 0 : index
      %c0_28 = arith.constant 0 : index
      %46 = vector.load %arg8[%c0_27, %c0_28] : memref<8x128xf32, #tpu.memory_space<vmem>>, vector<8x128xf32>
      tpu.vector_store %arg8[%c0_27, %c0_28], %45 {strides = array<i32>} : memref<8x128xf32, #tpu.memory_space<vmem>>, vector<8x128xf32>,
    } else {
    }
    %c0 = arith.constant 0 : index
    %c0_1 = arith.constant 0 : index
    %c0_2 = arith.constant 0 : index
    %3 = vector.load %arg1[%c0, %c0_1, %c0_2] : memref<1x8x512xf32, #tpu.memory_space<vmem>>, vector<1x8x512xf32>
    %4 = vector.shape_cast %3 : vector<1x8x512xf32> to vector<8x512xf32>
    %c0_3 = arith.constant 0 : index
    %c0_4 = arith.constant 0 : index
    %5 = vector.load %arg8[%c0_3, %c0_4] : memref<8x128xf32, #tpu.memory_space<vmem>>, vector<8x128xf32>
    %c0_5 = arith.constant 0 : index
    %c0_6 = arith.constant 0 : index
    %6 = vector.load %arg2[%c0_5, %c0_6] : memref<128x512xf32, #tpu.memory_space<vmem>>, vector<128x512xf32>
    %cst = arith.constant dense<0.000000e+00> : vector<8x512xf32>
    %7 = tpu.matmul %5, %6, %cst {dimension_numbers = #tpu.dot_dimension_numbers<[1], [0], [0], [1], [0, 0, 1, 1], [], []>} : vector<8x128xf32>, vector<128x512xf32>, vector<8x512xf32> -> vector<8x512xf32>
    %8 = arith.addf %4, %7 : vector<8x512xf32>
    %9 = vector.extract_strided_slice %8 {offsets = [0, 0], sizes = [8, 128], strides = [1, 1]} : vector<8x512xf32> to vector<8x128xf32>
    %10 = arith.negf %9 : vector<8x128xf32>
    %11 = math.exp %10 : vector<8x128xf32>
    %cst_7 = arith.constant 1.000000e+00 : f32
    %12 = vector.broadcast %cst_7 : f32 to vector<8x128xf32>
    %13 = arith.addf %12, %11 : vector<8x128xf32>
    %14 = arith.divf %12, %13 : vector<8x128xf32>
    %15 = vector.extract_strided_slice %8 {offsets = [0, 128], sizes = [8, 128], strides = [1, 1]} : vector<8x512xf32> to vector<8x128xf32>
    %16 = arith.negf %15 : vector<8x128xf32>
    %17 = math.exp %16 : vector<8x128xf32>
    %cst_8 = arith.constant 1.000000e+00 : f32
    %18 = vector.broadcast %cst_8 : f32 to vector<8x128xf32>
    %19 = arith.addf %18, %17 : vector<8x128xf32>
    %20 = arith.divf %18, %19 : vector<8x128xf32>
    %21 = vector.extract_strided_slice %8 {offsets = [0, 256], sizes = [8, 128], strides = [1, 1]} : vector<8x512xf32> to vector<8x128xf32>
    %22 = math.tanh %21 : vector<8x128xf32>
    %23 = vector.extract_strided_slice %8 {offsets = [0, 384], sizes = [8, 128], strides = [1, 1]} : vector<8x512xf32> to vector<8x128xf32>
    %24 = arith.negf %23 : vector<8x128xf32>
    %25 = math.exp %24 : vector<8x128xf32>
    %cst_9 = arith.constant 1.000000e+00 : f32
    %26 = vector.broadcast %cst_9 : f32 to vector<8x128xf32>
    %27 = arith.addf %26, %25 : vector<8x128xf32>
    %28 = arith.divf %26, %27 : vector<8x128xf32>
    %29 = arith.mulf %22, %20 : vector<8x128xf32>
    %c0_10 = arith.constant 0 : index
    %c0_11 = arith.constant 0 : index
    %30 = vector.load %arg7[%c0_10, %c0_11] : memref<8x128xf32, #tpu.memory_space<vmem>>, vector<8x128xf32>
    %31 = arith.mulf %14, %30 : vector<8x128xf32>
    %32 = arith.addf %29, %31 : vector<8x128xf32>
    %33 = math.tanh %32 : vector<8x128xf32>
    %34 = arith.mulf %28, %33 : vector<8x128xf32>
    %c0_12 = arith.constant 0 : index
    %c0_13 = arith.constant 0 : index
    %35 = vector.load %arg7[%c0_12, %c0_13] : memref<8x128xf32, #tpu.memory_space<vmem>>, vector<8x128xf32>
    tpu.vector_store %arg7[%c0_12, %c0_13], %32 {strides = array<i32>} : memref<8x128xf32, #tpu.memory_space<vmem>>, vector<8x128xf32>,
    %c0_14 = arith.constant 0 : index
    %c0_15 = arith.constant 0 : index
    %36 = vector.load %arg8[%c0_14, %c0_15] : memref<8x128xf32, #tpu.memory_space<vmem>>, vector<8x128xf32>
    tpu.vector_store %arg8[%c0_14, %c0_15], %34 {strides = array<i32>} : memref<8x128xf32, #tpu.memory_space<vmem>>, vector<8x128xf32>,
    %c0_16 = arith.constant 0 : index
    %c0_17 = arith.constant 0 : index
    %c0_18 = arith.constant 0 : index
    %37 = vector.load %arg5[%c0_16, %c0_17, %c0_18] : memref<1x8x128xf32, #tpu.memory_space<vmem>>, vector<1x8x128xf32>
    %38 = vector.shape_cast %37 : vector<1x8x128xf32> to vector<8x128xf32>
    %39 = vector.shape_cast %34 : vector<8x128xf32> to vector<1x8x128xf32>
    tpu.vector_store %arg5[%c0_16, %c0_17, %c0_18], %39 {strides = array<i32>} : memref<1x8x128xf32, #tpu.memory_space<vmem>>, vector<1x8x128xf32>,
    %c0_i32_19 = arith.constant 0 : i32
    %40 = arith.cmpi eq, %arg0, %c0_i32_19 : i32
    %41 = arith.extui %40 : i1 to i32
    %c0_i32_20 = arith.constant 0 : i32
    %42 = arith.cmpi ne, %41, %c0_i32_20 : i32
    scf.if %42 {
      %c0_21 = arith.constant 0 : index
      %c0_22 = arith.constant 0 : index
      %43 = vector.load %arg6[%c0_21, %c0_22] : memref<8x384xf32, #tpu.memory_space<vmem>>, vector<8x128xf32>
      tpu.vector_store %arg6[%c0_21, %c0_22], %28 {strides = array<i32>} : memref<8x384xf32, #tpu.memory_space<vmem>>, vector<8x128xf32>,
      %c0_23 = arith.constant 0 : index
      %c128 = arith.constant 128 : index
      %44 = vector.load %arg6[%c0_23, %c128] : memref<8x384xf32, #tpu.memory_space<vmem>>, vector<8x128xf32>
      tpu.vector_store %arg6[%c0_23, %c128], %32 {strides = array<i32>} : memref<8x384xf32, #tpu.memory_space<vmem>>, vector<8x128xf32>,
      %c0_24 = arith.constant 0 : index
      %c256 = arith.constant 256 : index
      %45 = vector.load %arg6[%c0_24, %c256] : memref<8x384xf32, #tpu.memory_space<vmem>>, vector<8x128xf32>
      tpu.vector_store %arg6[%c0_24, %c256], %34 {strides = array<i32>} : memref<8x384xf32, #tpu.memory_space<vmem>>, vector<8x128xf32>,
    } else {
    }
    return
  }
  func.func @transform_0(%arg0: i32) -> (i32, i32, i32) {
    %c0_i32 = arith.constant 0 : i32
    %c0_i32_0 = arith.constant 0 : i32
    %c0_i32_1 = arith.constant 0 : i32
    return %arg0, %c0_i32, %c0_i32_0 : i32, i32, i32
  }
  func.func @transform_1(%arg0: i32) -> (i32, i32) {
    %c0_i32 = arith.constant 0 : i32
    %c0_i32_0 = arith.constant 0 : i32
    %c0_i32_1 = arith.constant 0 : i32
    return %c0_i32, %c0_i32_0 : i32, i32
  }
  func.func @transform_2(%arg0: i32) -> (i32, i32) {
    %c0_i32 = arith.constant 0 : i32
    %c0_i32_0 = arith.constant 0 : i32
    %c0_i32_1 = arith.constant 0 : i32
    return %c0_i32, %c0_i32_0 : i32, i32
  }
  func.func @transform_3(%arg0: i32) -> (i32, i32) {
    %c0_i32 = arith.constant 0 : i32
    %c0_i32_0 = arith.constant 0 : i32
    %c0_i32_1 = arith.constant 0 : i32
    return %c0_i32, %c0_i32_0 : i32, i32
  }
  func.func @transform_4(%arg0: i32) -> (i32, i32, i32) {
    %c0_i32 = arith.constant 0 : i32
    %c0_i32_0 = arith.constant 0 : i32
    %c0_i32_1 = arith.constant 0 : i32
    return %arg0, %c0_i32, %c0_i32_0 : i32, i32, i32
  }
  func.func @transform_5(%arg0: i32) -> (i32, i32) {
    %c0_i32 = arith.constant 0 : i32
    %c0_i32_0 = arith.constant 0 : i32
    %c0_i32_1 = arith.constant 0 : i32
    return %c0_i32, %c0_i32_0 : i32, i32
  }
}

</mosaic_0001>

<llo_original>
// kernel: tpu_custom_call.1
$region0: #{tpu_custom_call.1}
  #allocation0 [shape = 'u32[]', space=smem, size = 0x4, offset = 0x4, fixed_abs, tag = 'smem constant byte address 0x4 - core index']
  #allocation1 [shape = 'u32[144,128]{1,0:T(1,128)}', space=vmem, size = 0x12000, scoped, tag = 'internal scratch']
  #allocation2 [shape = 'f32[8,128]{1,0:T(8,128)}', space=vmem, size = 0x1000, scoped, tag = 'scratch operand']
  #allocation3 [shape = 'f32[8,128]{1,0:T(8,128)}', space=vmem, size = 0x1000, scoped, tag = 'scratch operand']
  %s0 = inlined_call_operand.hbm [shape: f32[1,8,512], index: 0, kind: input, shape index: {}]
  %s1 = inlined_call_operand.hbm [shape: f32[128,512], index: 1, kind: input, shape index: {}]
  %s2 = inlined_call_operand.hbm [shape: f32[8,128], index: 2, kind: input, shape index: {}]
  %s3 = inlined_call_operand.hbm [shape: f32[8,128], index: 3, kind: input, shape index: {}]
  %s4 = inlined_call_operand.hbm [shape: f32[1,8,128], index: 4, kind: output, shape index: {0}]
  %s5 = inlined_call_operand.hbm [shape: f32[8,384], index: 5, kind: output, shape index: {1}]
  %6 = xla_tuple %s4, %s5
  %s7 = sld [smem:[#allocation0]]
  $region58: #{tpu_custom_call.1} parent=0
    _
  %s9 = ssub.s32 1, %s7
  %s10 = scalar_select 0, %s9, %s7
  $region1: #{tpu_custom_call.1} parent=0
    #allocation4 [shape = 'u8[16384]{0}', space=vmem, size = 0x4000, scoped, tag = 'input window, operand 0, single buffered']
    #allocation5 [shape = 's32[1]{0}', space=sflag, size = 0x4, scoped, tag = 'scoped memory for tpu_custom_call.1']
    #allocation6 [shape = 's32[1]{0}', space=sflag, size = 0x4, scoped, tag = 'scoped memory for tpu_custom_call.1']
    #allocation7 [shape = 'u8[262144]{0}', space=vmem, size = 0x40000, scoped, tag = 'input window, operand 1, single buffered']
    #allocation8 [shape = 's32[1]{0}', space=sflag, size = 0x4, scoped, tag = 'scoped memory for tpu_custom_call.1']
    #allocation9 [shape = 'u8[4096]{0}', space=vmem, size = 0x1000, scoped, tag = 'input window, operand 2, single buffered']
    #allocation10 [shape = 'u8[4096]{0}', space=vmem, size = 0x1000, scoped, tag = 'input window, operand 3, single buffered']
    #allocation11 [shape = 's32[1]{0}', space=sflag, size = 0x4, scoped, tag = 'scoped memory for tpu_custom_call.1']
    #allocation12 [shape = 'u8[4096]{0}', space=vmem, size = 0x1000, scoped, tag = 'output window, operand 0, single buffered']
    #allocation13 [shape = 'u8[12288]{0}', space=vmem, size = 0x3000, scoped, tag = 'output window, operand 1, single buffered']
    #allocation14 [shape = 's32[1]{0}', space=sflag, size = 0x4, scoped, tag = 'scoped memory for tpu_custom_call.1']
    %11 = vsyncpa [#allocation5], 0
    %12 = vsyncpa [#allocation8], 0
    %13 = vsyncpa [#allocation11], 0
    %14 = vsyncpa [#allocation6], 0
    %15 = vsyncpa [#allocation14], 0
    // Predicated region
    $region2: #{tpu_custom_call.1} parent=1 // pred_check
      _
    $region3: #{tpu_custom_call.1} parent=1 // pred_check_branch
      %17 = sbr.rel (0) target = $region5
    $region4: #{tpu_custom_call.1} parent=1 // pred_region
      %s19 = ssub.s32 512, 512
      %20 = vsyncadd [#allocation5], %s19
      %s22 = sshll.u32 [#allocation4], 4
      %s23 = int_to_ptr.vmem [resolvable:$true] %s22
      %25 = dma.hbm_to_vmem [thread:$0]  %s0, 512, %s23, [#allocation5]
    $region5: #{tpu_custom_call.1} parent=1 // pred_fallthru
      _
    // Predicated region
    $region6: #{tpu_custom_call.1} parent=1 // pred_check
      _
    $region7: #{tpu_custom_call.1} parent=1 // pred_check_branch
      %27 = sbr.rel (0) target = $region9
    $region8: #{tpu_custom_call.1} parent=1 // pred_region
      %s29 = ssub.s32 8192, 8192
      %30 = vsyncadd [#allocation8], %s29
      %s31 = sshll.u32 [#allocation7], 4
      %s32 = int_to_ptr.vmem [resolvable:$true] %s31
      %37 = dma.hbm_to_vmem [thread:$0]  %s1, 8192, %s32, [#allocation8], 512, 512, 32
    $region9: #{tpu_custom_call.1} parent=1 // pred_fallthru
      _
    // Predicated region
    $region10: #{tpu_custom_call.1} parent=1 // pred_check
      _
    $region11: #{tpu_custom_call.1} parent=1 // pred_check_branch
      %39 = sbr.rel (0) target = $region13
    $region12: #{tpu_custom_call.1} parent=1 // pred_region
      %s41 = ssub.s32 128, 128
      %42 = vsyncadd [#allocation8], %s41
      %s44 = sshll.u32 [#allocation9], 4
      %s45 = int_to_ptr.vmem [resolvable:$true] %s44
      %47 = dma.hbm_to_vmem [thread:$0]  %s2, 128, %s45, [#allocation8]
    $region13: #{tpu_custom_call.1} parent=1 // pred_fallthru
      _
    // Predicated region
    $region14: #{tpu_custom_call.1} parent=1 // pred_check
      _
    $region15: #{tpu_custom_call.1} parent=1 // pred_check_branch
      %49 = sbr.rel (0) target = $region17
    $region16: #{tpu_custom_call.1} parent=1 // pred_region
      %s51 = ssub.s32 128, 128
      %52 = vsyncadd [#allocation11], %s51
      %s54 = sshll.u32 [#allocation10], 4
      %s55 = int_to_ptr.vmem [resolvable:$true] %s54
      %57 = dma.hbm_to_vmem [thread:$0]  %s3, 128, %s55, [#allocation11]
    $region17: #{tpu_custom_call.1} parent=1 // pred_fallthru
      _
    // Predicated region
    $region18: #{tpu_custom_call.1} parent=1 // pred_check
      _
    $region19: #{tpu_custom_call.1} parent=1 // pred_check_branch
      %59 = sbr.rel (0) target = $region21
    $region20: #{tpu_custom_call.1} parent=1 // pred_region
      %60 = dma.done [#allocation5], 512
    $region21: #{tpu_custom_call.1} parent=1 // pred_fallthru
      _
    // Predicated region
    $region22: #{tpu_custom_call.1} parent=1 // pred_check
      _
    $region23: #{tpu_custom_call.1} parent=1 // pred_check_branch
      %62 = sbr.rel (0) target = $region25
    $region24: #{tpu_custom_call.1} parent=1 // pred_region
      %63 = dma.done [#allocation8], 8192
    $region25: #{tpu_custom_call.1} parent=1 // pred_fallthru
      _
    // Predicated region
    $region26: #{tpu_custom_call.1} parent=1 // pred_check
      _
    $region27: #{tpu_custom_call.1} parent=1 // pred_check_branch
      %65 = sbr.rel (0) target = $region29
    $region28: #{tpu_custom_call.1} parent=1 // pred_region
      %66 = dma.done [#allocation8], 128
    $region29: #{tpu_custom_call.1} parent=1 // pred_fallthru
      _
    // Predicated region
    $region30: #{tpu_custom_call.1} parent=1 // pred_check
      _
    $region31: #{tpu_custom_call.1} parent=1 // pred_check_branch
      %68 = sbr.rel (0) target = $region33
    $region32: #{tpu_custom_call.1} parent=1 // pred_region
      %69 = dma.done [#allocation11], 128
    $region33: #{tpu_custom_call.1} parent=1 // pred_fallthru
      _
    %p70 = scmp.eq.s32.totalorder 0, 0
    // Predicated region
    $region34: #{tpu_custom_call.1} parent=1 // pred_check
      %p71 = pneg %p70
    $region35: #{tpu_custom_call.1} parent=1 // pred_check_branch
      %73 = sbr.rel (%p71) target = $region37
    $region36: #{tpu_custom_call.1} parent=1 // pred_region
      %v74 = vld [vmem:[#allocation9] sm:$0xff]
      %75 = vst [vmem:[#allocation2] sm:$0xff] %v74
      %v76 = vld [vmem:[#allocation10] sm:$0xff]
      %77 = vst [vmem:[#allocation3] sm:$0xff] %v76
    $region37: #{tpu_custom_call.1} parent=1 // pred_fallthru
      _
    %v78 = vld [vmem:[#allocation4] sm:$0xff]
    %v79 = vld [vmem:[#allocation4 + $0x8] sm:$0xff]
    %v80 = vld [vmem:[#allocation4 + $0x10] sm:$0xff]
    %v81 = vld [vmem:[#allocation4 + $0x18] sm:$0xff]
    %v82 = vld [vmem:[#allocation3] sm:$0xff]
    %v83 = vld [vmem:[#allocation7] sm:$0xff]
    %v84 = vld [vmem:[#allocation7 + $0x8] sm:$0xff]
    %v85 = vld [vmem:[#allocation7 + $0x10] sm:$0xff]
    %v86 = vld [vmem:[#allocation7 + $0x18] sm:$0xff]
    %v87 = vld [vmem:[#allocation7 + $0x20] sm:$0xff]
    %v88 = vld [vmem:[#allocation7 + $0x28] sm:$0xff]
    %v89 = vld [vmem:[#allocation7 + $0x30] sm:$0xff]
    %v90 = vld [vmem:[#allocation7 + $0x38] sm:$0xff]
    %v91 = vld [vmem:[#allocation7 + $0x40] sm:$0xff]
    %v92 = vld [vmem:[#allocation7 + $0x48] sm:$0xff]
    %v93 = vld [vmem:[#allocation7 + $0x50] sm:$0xff]
    %v94 = vld [vmem:[#allocation7 + $0x58] sm:$0xff]
    %v95 = vld [vmem:[#allocation7 + $0x60] sm:$0xff]
    %v96 = vld [vmem:[#allocation7 + $0x68] sm:$0xff]
    %v97 = vld [vmem:[#allocation7 + $0x70] sm:$0xff]
    %v98 = vld [vmem:[#allocation7 + $0x78] sm:$0xff]
    %v99 = vld [vmem:[#allocation7 + $0x80] sm:$0xff]
    %v100 = vld [vmem:[#allocation7 + $0x88] sm:$0xff]
    %v101 = vld [vmem:[#allocation7 + $0x90] sm:$0xff]
    %v102 = vld [vmem:[#allocation7 + $0x98] sm:$0xff]
    %v103 = vld [vmem:[#allocation7 + $0xa0] sm:$0xff]
    %v104 = vld [vmem:[#allocation7 + $0xa8] sm:$0xff]
    %v105 = vld [vmem:[#allocation7 + $0xb0] sm:$0xff]
    %v106 = vld [vmem:[#allocation7 + $0xb8] sm:$0xff]
    %v107 = vld [vmem:[#allocation7 + $0xc0] sm:$0xff]
    %v108 = vld [vmem:[#allocation7 + $0xc8] sm:$0xff]
    %v109 = vld [vmem:[#allocation7 + $0xd0] sm:$0xff]
    %v110 = vld [vmem:[#allocation7 + $0xd8] sm:$0xff]
    %v111 = vld [vmem:[#allocation7 + $0xe0] sm:$0xff]
    %v112 = vld [vmem:[#allocation7 + $0xe8] sm:$0xff]
    %v113 = vld [vmem:[#allocation7 + $0xf0] sm:$0xff]
    %v114 = vld [vmem:[#allocation7 + $0xf8] sm:$0xff]
    %v115 = vld [vmem:[#allocation7 + $0x100] sm:$0xff]
    %v116 = vld [vmem:[#allocation7 + $0x108] sm:$0xff]
    %v117 = vld [vmem:[#allocation7 + $0x110] sm:$0xff]
    %v118 = vld [vmem:[#allocation7 + $0x118] sm:$0xff]
    %v119 = vld [vmem:[#allocation7 + $0x120] sm:$0xff]
    %v120 = vld [vmem:[#allocation7 + $0x128] sm:$0xff]
    %v121 = vld [vmem:[#allocation7 + $0x130] sm:$0xff]
    %v122 = vld [vmem:[#allocation7 + $0x138] sm:$0xff]
    %v123 = vld [vmem:[#allocation7 + $0x140] sm:$0xff]
    %v124 = vld [vmem:[#allocation7 + $0x148] sm:$0xff]
    %v125 = vld [vmem:[#allocation7 + $0x150] sm:$0xff]
    %v126 = vld [vmem:[#allocation7 + $0x158] sm:$0xff]
    %v127 = vld [vmem:[#allocation7 + $0x160] sm:$0xff]
    %v128 = vld [vmem:[#allocation7 + $0x168] sm:$0xff]
    %v129 = vld [vmem:[#allocation7 + $0x170] sm:$0xff]
    %v130 = vld [vmem:[#allocation7 + $0x178] sm:$0xff]
    %v131 = vld [vmem:[#allocation7 + $0x180] sm:$0xff]
    %v132 = vld [vmem:[#allocation7 + $0x188] sm:$0xff]
    %v133 = vld [vmem:[#allocation7 + $0x190] sm:$0xff]
    %v134 = vld [vmem:[#allocation7 + $0x198] sm:$0xff]
    %v135 = vld [vmem:[#allocation7 + $0x1a0] sm:$0xff]
    %v136 = vld [vmem:[#allocation7 + $0x1a8] sm:$0xff]
    %v137 = vld [vmem:[#allocation7 + $0x1b0] sm:$0xff]
    %v138 = vld [vmem:[#allocation7 + $0x1b8] sm:$0xff]
    %v139 = vld [vmem:[#allocation7 + $0x1c0] sm:$0xff]
    %v140 = vld [vmem:[#allocation7 + $0x1c8] sm:$0xff]
    %v141 = vld [vmem:[#allocation7 + $0x1d0] sm:$0xff]
    %v142 = vld [vmem:[#allocation7 + $0x1d8] sm:$0xff]
    %v143 = vld [vmem:[#allocation7 + $0x1e0] sm:$0xff]
    %v144 = vld [vmem:[#allocation7 + $0x1e8] sm:$0xff]
    %v145 = vld [vmem:[#allocation7 + $0x1f0] sm:$0xff]
    %v146 = vld [vmem:[#allocation7 + $0x1f8] sm:$0xff]
    %147 = vmatprep.subr.mxu0 %v144
    %148 = vmatpush1.msra.mxu0 %v143
    %149 = vmatprep.subr.mxu0 %v140
    %150 = vmatpush1.msra.mxu0 %v139
    %151 = vmatprep.subr.mxu0 %v136
    %152 = vmatpush1.msra.mxu0 %v135
    %153 = vmatprep.subr.mxu0 %v132
    %154 = vmatpush1.msra.mxu0 %v131
    %155 = vmatprep.subr.mxu0 %v128
    %156 = vmatpush1.msra.mxu0 %v127
    %157 = vmatprep.subr.mxu0 %v124
    %158 = vmatpush1.msra.mxu0 %v123
    %159 = vmatprep.subr.mxu0 %v120
    %160 = vmatpush1.msra.mxu0 %v119
    %161 = vmatprep.subr.mxu0 %v116
    %162 = vmatpush1.msra.mxu0 %v115
    %163 = vmatprep.subr.mxu0 %v112
    %164 = vmatpush1.msra.mxu0 %v111
    %165 = vmatprep.subr.mxu0 %v108
    %166 = vmatpush1.msra.mxu0 %v107
    %167 = vmatprep.subr.mxu0 %v104
    %168 = vmatpush1.msra.mxu0 %v103
    %169 = vmatprep.subr.mxu0 %v100
    %170 = vmatpush1.msra.mxu0 %v99
    %171 = vmatprep.subr.mxu0 %v96
    %172 = vmatpush1.msra.mxu0 %v95
    %173 = vmatprep.subr.mxu0 %v92
    %174 = vmatpush1.msra.mxu0 %v91
    %175 = vmatprep.subr.mxu0 %v88
    %176 = vmatpush1.msra.mxu0 %v87
    %177 = vmatprep.subr.mxu0 %v84
    %178 = vmatpush1.msra.mxu0 %v83
    %179 = vmatprep.subr.mxu0 0.0
    %180 = vmatpush2.msra.mxu0 0.0
    %181 = vmatprep.subr.mxu0 0.0
    %182 = vmatpush2.msra.mxu0 0.0
    %183 = vmatprep.subr.mxu0 0.0
    %184 = vmatpush2.msra.mxu0 0.0
    %185 = vmatprep.subr.mxu0 0.0
    %186 = vmatpush2.msra.mxu0 0.0
    %187 = vmatprep.subr.mxu0 0.0
    %188 = vmatpush2.msra.mxu0 0.0
    %189 = vmatprep.subr.mxu0 0.0
    %190 = vmatpush2.msra.mxu0 0.0
    %191 = vmatprep.subr.mxu0 0.0
    %192 = vmatpush2.msra.mxu0 0.0
    %193 = vmatprep.subr.mxu0 0.0
    %194 = vmatpush2.msra.mxu0 0.0
    %195 = vmatprep.subr.mxu0 0.0
    %196 = vmatpush2.msra.mxu0 0.0
    %197 = vmatprep.subr.mxu0 0.0
    %198 = vmatpush2.msra.mxu0 0.0
    %199 = vmatprep.subr.mxu0 0.0
    %200 = vmatpush2.msra.mxu0 0.0
    %201 = vmatprep.subr.mxu0 0.0
    %202 = vmatpush2.msra.mxu0 0.0
    %203 = vmatprep.subr.mxu0 0.0
    %204 = vmatpush2.msra.mxu0 0.0
    %205 = vmatprep.subr.mxu0 0.0
    %206 = vmatpush2.msra.mxu0 0.0
    %207 = vmatprep.subr.mxu0 0.0
    %208 = vmatpush2.msra.mxu0 0.0
    %209 = vmatprep.subr.mxu0 0.0
    %210 = vmatpush2.msra.mxu0 0.0
    %211 = vmatprep.mubr.f32.mxu0 0.0
    %212 = vmatmul.mubr.f32.gmra.mxu0 %v82
    %v213 = vpop.f32.mrf.mxu0
    %v214 = vadd.f32 0.0, %v213
    %v215 = vpop.f32.mrf.mxu0
    %v216 = vadd.f32 0.0, %v215
    %217 = vdwg.mxu0
    %218 = vmatprep.subr.mxu0 %v146
    %219 = vmatpush1.msra.mxu0 %v145
    %220 = vmatprep.subr.mxu0 %v142
    %221 = vmatpush1.msra.mxu0 %v141
    %222 = vmatprep.subr.mxu0 %v138
    %223 = vmatpush1.msra.mxu0 %v137
    %224 = vmatprep.subr.mxu0 %v134
    %225 = vmatpush1.msra.mxu0 %v133
    %226 = vmatprep.subr.mxu0 %v130
    %227 = vmatpush1.msra.mxu0 %v129
    %228 = vmatprep.subr.mxu0 %v126
    %229 = vmatpush1.msra.mxu0 %v125
    %230 = vmatprep.subr.mxu0 %v122
    %231 = vmatpush1.msra.mxu0 %v121
    %232 = vmatprep.subr.mxu0 %v118
    %233 = vmatpush1.msra.mxu0 %v117
    %234 = vmatprep.subr.mxu0 %v114
    %235 = vmatpush1.msra.mxu0 %v113
    %236 = vmatprep.subr.mxu0 %v110
    %237 = vmatpush1.msra.mxu0 %v109
    %238 = vmatprep.subr.mxu0 %v106
    %239 = vmatpush1.msra.mxu0 %v105
    %240 = vmatprep.subr.mxu0 %v102
    %241 = vmatpush1.msra.mxu0 %v101
    %242 = vmatprep.subr.mxu0 %v98
    %243 = vmatpush1.msra.mxu0 %v97
    %244 = vmatprep.subr.mxu0 %v94
    %245 = vmatpush1.msra.mxu0 %v93
    %246 = vmatprep.subr.mxu0 %v90
    %247 = vmatpush1.msra.mxu0 %v89
    %248 = vmatprep.subr.mxu0 %v86
    %249 = vmatpush1.msra.mxu0 %v85
    %250 = vmatprep.subr.mxu0 0.0
    %251 = vmatpush2.msra.mxu0 0.0
    %252 = vmatprep.subr.mxu0 0.0
    %253 = vmatpush2.msra.mxu0 0.0
    %254 = vmatprep.subr.mxu0 0.0
    %255 = vmatpush2.msra.mxu0 0.0
    %256 = vmatprep.subr.mxu0 0.0
    %257 = vmatpush2.msra.mxu0 0.0
    %258 = vmatprep.subr.mxu0 0.0
    %259 = vmatpush2.msra.mxu0 0.0
    %260 = vmatprep.subr.mxu0 0.0
    %261 = vmatpush2.msra.mxu0 0.0
    %262 = vmatprep.subr.mxu0 0.0
    %263 = vmatpush2.msra.mxu0 0.0
    %264 = vmatprep.subr.mxu0 0.0
    %265 = vmatpush2.msra.mxu0 0.0
    %266 = vmatprep.subr.mxu0 0.0
    %267 = vmatpush2.msra.mxu0 0.0
    %268 = vmatprep.subr.mxu0 0.0
    %269 = vmatpush2.msra.mxu0 0.0
    %270 = vmatprep.subr.mxu0 0.0
    %271 = vmatpush2.msra.mxu0 0.0
    %272 = vmatprep.subr.mxu0 0.0
    %273 = vmatpush2.msra.mxu0 0.0
    %274 = vmatprep.subr.mxu0 0.0
    %275 = vmatpush2.msra.mxu0 0.0
    %276 = vmatprep.subr.mxu0 0.0
    %277 = vmatpush2.msra.mxu0 0.0
    %278 = vmatprep.subr.mxu0 0.0
    %279 = vmatpush2.msra.mxu0 0.0
    %280 = vmatprep.subr.mxu0 0.0
    %281 = vmatpush2.msra.mxu0 0.0
    %282 = vmatprep.mubr.f32.mxu0 0.0
    %283 = vmatmul.mubr.f32.gmra.mxu0 %v82
    %v284 = vpop.f32.mrf.mxu0
    %v285 = vadd.f32 0.0, %v284
    %v286 = vpop.f32.mrf.mxu0
    %v287 = vadd.f32 0.0, %v286
    %288 = vdwg.mxu0
    %v289 = vadd.f32 %v78, %v214
    %v290 = vadd.f32 %v79, %v216
    %v291 = vadd.f32 %v80, %v285
    %v292 = vadd.f32 %v81, %v287
    %v293 = vxor.u32 %v289, 2147483648
    %v294 = vmul.f32 %v293, 1.442695
    %v295 = vpow.pop %v294
    %v296 = vadd.f32 %v295, 1.0
    %v297 = vrcp.pop %v296
    %v298 = vmul.f32 1.0, %v297
    %v299 = vxor.u32 %v290, 2147483648
    %v300 = vmul.f32 %v299, 1.442695
    %v301 = vpow.pop %v300
    %v302 = vadd.f32 %v301, 1.0
    %v303 = vrcp.pop %v302
    %v304 = vmul.f32 1.0, %v303
    %v305 = vtanh.pop %v291
    %v306 = vxor.u32 %v292, 2147483648
    %v307 = vmul.f32 %v306, 1.442695
    %v308 = vpow.pop %v307
    %v309 = vadd.f32 %v308, 1.0
    %v310 = vrcp.pop %v309
    %v311 = vmul.f32 1.0, %v310
    %v312 = vmul.f32 %v305, %v304
    %v313 = vld [vmem:[#allocation2] sm:$0xff]
    %v314 = vmul.f32 %v298, %v313
    %v315 = vadd.f32 %v312, %v314
    %v316 = vtanh.pop %v315
    %v317 = vmul.f32 %v311, %v316
    %318 = vst [vmem:[#allocation2] sm:$0xff] %v315
    %319 = vst [vmem:[#allocation3] sm:$0xff] %v317
    %320 = vst [vmem:[#allocation12] sm:$0xff] %v317
    // Predicated region
    $region38: #{tpu_custom_call.1} parent=1 // pred_check
      %p321 = pneg %p70
    $region39: #{tpu_custom_call.1} parent=1 // pred_check_branch
      %323 = sbr.rel (%p321) target = $region41
    $region40: #{tpu_custom_call.1} parent=1 // pred_region
      %324 = vst [vmem:[#allocation13] sm:$0xff] %v311
      %325 = vst [vmem:[#allocation13 + $0x8] sm:$0xff] %v315
      %326 = vst [vmem:[#allocation13 + $0x10] sm:$0xff] %v317
    $region41: #{tpu_custom_call.1} parent=1 // pred_fallthru
      _
    // Predicated region
    $region42: #{tpu_custom_call.1} parent=1 // pred_check
      _
    $region43: #{tpu_custom_call.1} parent=1 // pred_check_branch
      %328 = sbr.rel (0) target = $region45
    $region44: #{tpu_custom_call.1} parent=1 // pred_region
      %s330 = ssub.s32 128, 128
      %331 = vsyncadd [#allocation6], %s330
      %s333 = sshll.u32 [#allocation12], 4
      %s334 = int_to_ptr.vmem [resolvable:$true] %s333
      %336 = dma.vmem_to_hbm [thread:$0]  %s334, 128, %s4, [#allocation6]
    $region45: #{tpu_custom_call.1} parent=1 // pred_fallthru
      _
    // Predicated region
    $region46: #{tpu_custom_call.1} parent=1 // pred_check
      _
    $region47: #{tpu_custom_call.1} parent=1 // pred_check_branch
      %338 = sbr.rel (0) target = $region49
    $region48: #{tpu_custom_call.1} parent=1 // pred_region
      %s340 = ssub.s32 384, 384
      %341 = vsyncadd [#allocation14], %s340
      %s343 = sshll.u32 [#allocation13], 4
      %s344 = int_to_ptr.vmem [resolvable:$true] %s343
      %346 = dma.vmem_to_hbm [thread:$0]  %s344, 384, %s5, [#allocation14]
    $region49: #{tpu_custom_call.1} parent=1 // pred_fallthru
      _
    // Predicated region
    $region50: #{tpu_custom_call.1} parent=1 // pred_check
      _
    $region51: #{tpu_custom_call.1} parent=1 // pred_check_branch
      %348 = sbr.rel (0) target = $region53
    $region52: #{tpu_custom_call.1} parent=1 // pred_region
      %349 = dma.done [#allocation6], 128
    $region53: #{tpu_custom_call.1} parent=1 // pred_fallthru
      _
    // Predicated region
    $region54: #{tpu_custom_call.1} parent=1 // pred_check
      _
    $region55: #{tpu_custom_call.1} parent=1 // pred_check_branch
      %351 = sbr.rel (0) target = $region57
    $region56: #{tpu_custom_call.1} parent=1 // pred_region
      %352 = dma.done [#allocation14], 384
    $region57: #{tpu_custom_call.1} parent=1 // pred_fallthru
      _
    %353 = vsyncpa [#allocation5], 1
    %354 = vsyncpa [#allocation8], 1
    %355 = vsyncpa [#allocation11], 1
    %356 = vsyncpa [#allocation6], 1
    %357 = vsyncpa [#allocation14], 1

</llo_original>
